<compile_context>
chip_gen: v6e
topology: v6e:2x2x1
jax: 0.10.0
libtpu: 0.0.40
codegen_flags: <defaults>
</compile_context>

<pallas_src>
import jax
import jax.numpy as jnp
from jax.experimental import pallas as pl
from jax.experimental.pallas import tpu as pltpu


def _sobelxy_kernel(x_ref, halo_ref, o_ref):
    # x_ref   : (3, TH, W)  unpadded input row tile (native dtype)
    # halo_ref: (2, W)      channel-summed rows just above / below this tile
    #                       (zeros at the true image top/bottom edges), f32
    # o_ref   : (TH, W)     fused Sobel output tile
    th, w = o_ref.shape
    f32 = jnp.float32

    # Channel reduction (identical 3x3 kernel over the 3 channels -> plain sum).
    s = (x_ref[0].astype(f32) + x_ref[1].astype(f32) + x_ref[2].astype(f32))   # (TH, W)

    # Row-shifted views via a (TH+2, W) value band: [top halo ; s ; bottom halo].
    band = jnp.concatenate([halo_ref[0:1, :], s, halo_ref[1:2, :]], axis=0)    # (TH+2, W)
    up  = band[0:th, :]          # s[r-1, c]
    mid = band[1:th + 1, :]      # s[r,   c]
    dn  = band[2:th + 2, :]      # s[r+1, c]

    # Column shifts with zero padding at the image borders (value level, 2 shifts):
    #   shift_left(up+mid)[c]  = s[r-1,c+1] + s[r,c+1]   (0 at c = W-1)
    #   shift_right(mid+dn)[c] = s[r,c-1]   + s[r+1,c-1] (0 at c = 0)
    zcol = jnp.zeros((th, 1), f32)
    right_taps = jnp.concatenate([(up + mid)[:, 1:], zcol], axis=1)
    left_taps  = jnp.concatenate([zcol, (mid + dn)[:, :-1]], axis=1)

    # (Kx+Ky)/2 stencil = [[0,1,1],[-1,0,1],[-1,-1,0]];  out = g/8 + 0.5
    g = (up - dn) + right_taps - left_taps
    o_ref[...] = (g * 0.125 + 0.5).astype(o_ref.dtype)


def _vmem_capacity_bytes():
    try:
        return int(pltpu.get_tpu_info().vmem_capacity_bytes)
    except Exception:
        return 64 * 1024 * 1024   # conservative (v7x per-TC); v5e/v6e have 128 MiB


def _pick_row_tile(h, w, n, itemsize, vmem_cap):
    """Largest multiple-of-8 divisor of H such that the (3, TH, W) input block is
    ~vmem_cap/32 (4 MiB on 128-MiB chips, 2 MiB on v7x), then shrunk if needed so
    the grid has >= 4 steps (megacore utilization on v7x)."""
    target = max(1 << 20, vmem_cap // 32)
    rows = target // max(1, 3 * itemsize * w)
    rows = max(8, min(rows, h))

    cands = [d for d in range(8, h + 1, 8) if h % d == 0]
    if h % 8 != 0 or not cands:
        cands = sorted(set(cands + [h]))
    th = max([d for d in cands if d <= rows], default=min(cands))

    while n * (h // th) < 4:
        smaller = [d for d in cands if d < th]
        if not smaller:
            break
        th = max(smaller)
    return th


def sobelxy(x, row_tile=None):
    """x: (N, 3, H, W) NCHW (f32 or bf16). Returns (N, 1, H, W) in x.dtype."""
    n, c, h, w = x.shape
    assert c == 3, "Sobelxy expects 3 input channels (weights are (1,3,3,3))"
    if x.dtype not in (jnp.float32, jnp.bfloat16, jnp.float16):
        x = x.astype(jnp.float32)
    out_dtype = x.dtype
    itemsize = jnp.dtype(x.dtype).itemsize

    vmem_cap = _vmem_capacity_bytes()
    th = _pick_row_tile(h, w, n, itemsize, vmem_cap) if row_tile is None else int(row_tile)
    assert h % th == 0 and (th % 8 == 0 or th == h), "row tile must divide H and be a multiple of 8 (or equal H)"
    n_tiles = h // th

    # Tiny channel-summed halo side band: for each row tile, the single image row
    # above and below it (zeros at the image border). Replaces any full-image pad.
    if n_tiles == 1:
        halo = jnp.zeros((n, 1, 2, w), jnp.float32)
    else:
        top = jnp.sum(x[:, :, th - 1:h - 1:th, :].astype(jnp.float32), axis=1)   # (N, T-1, W)
        bot = jnp.sum(x[:, :, th:h:th, :].astype(jnp.float32), axis=1)           # (N, T-1, W)
        top = jnp.pad(top, ((0, 0), (1, 0), (0, 0)))     # tile 0 has a zero top halo
        bot = jnp.pad(bot, ((0, 0), (0, 1), (0, 0)))     # last tile has a zero bottom halo
        halo = jnp.stack([top, bot], axis=2)              # (N, n_tiles, 2, W)

    # Scoped-VMEM limit from the actual double-buffered blocks + headroom,
    # capped at 3/4 of the physical per-core VMEM (48 MiB on v7x).
    out_itemsize = jnp.dtype(out_dtype).itemsize
    vmem_needed = (2 * 3 * th * w * itemsize          # input block, double buffered
                   + 2 * 2 * w * 4                    # halo block, double buffered
                   + 2 * th * w * out_itemsize        # output block, double buffered
                   + 10 * th * w * 4)                 # stencil temporaries headroom
    vmem_limit = int(min(max(2 * vmem_needed, 32 * 1024 * 1024), (vmem_cap * 3) // 4))

    return pl.pallas_call(
        _sobelxy_kernel,
        out_shape=jax.ShapeDtypeStruct((n, 1, h, w), out_dtype),
        grid=(n, n_tiles),
        in_specs=[
            # unpadded input row tile; batch dim squeezed
            pl.BlockSpec((None, 3, th, w), lambda b, i: (b, 0, i, 0)),
            # per-tile channel-summed halo rows (top, bottom)
            pl.BlockSpec((None, None, 2, w), lambda b, i: (b, i, 0, 0)),
        ],
        out_specs=pl.BlockSpec((None, None, th, w), lambda b, i: (b, 0, i, 0)),
        compiler_params=pltpu.CompilerParams(
            dimension_semantics=("parallel", "parallel"),
            vmem_limit_bytes=vmem_limit,
        ),
    )(x, halo)


def _reference(x):
    """Pure-JAX reference replicating F.conv2d (cross-correlation) semantics."""
    kx = jnp.array([[-1., 0., 1.], [-2., 0., 2.], [-1., 0., 1.]], jnp.float32)
    ky = jnp.array([[1., 2., 1.], [0., 0., 0.], [-1., -2., -1.]], jnp.float32)
    wx = jnp.broadcast_to(kx, (1, 3, 3, 3))
    wy = jnp.broadcast_to(ky, (1, 3, 3, 3))
    dn = jax.lax.conv_dimension_numbers(x.shape, wx.shape, ("NCHW", "OIHW", "NCHW"))
    sx = jax.lax.conv_general_dilated(x, wx, (1, 1), ((1, 1), (1, 1)), dimension_numbers=dn)
    sy = jax.lax.conv_general_dilated(x, wy, (1, 1), ((1, 1), (1, 1)), dimension_numbers=dn)
    sx = (sx + 4.0) / 8.0
    sy = (sy + 4.0) / 8.0
    return sx * 0.5 + sy * 0.5


if __name__ == "__main__":
    key = jax.random.PRNGKey(0)
    k1, k2 = jax.random.split(key)

    # Small shape implied by the module (C must be 3 for the (1,3,3,3) weights).
    x1 = jax.random.normal(k1, (2, 3, 16, 16), dtype=jnp.float32)
    out1 = jax.block_until_ready(sobelxy(x1))
    ref1 = _reference(x1)
    assert out1.shape == (2, 1, 16, 16)
    assert jnp.allclose(out1, ref1, atol=1e-4, rtol=1e-5), "mismatch (auto tile)"

    # Exercise the row-tiled halo path (4 row tiles, lane-dense W=128).
    x2 = jax.random.normal(k2, (1, 3, 32, 128), dtype=jnp.float32)
    out2 = jax.block_until_ready(sobelxy(x2, row_tile=8))
    ref2 = _reference(x2)
    assert out2.shape == (1, 1, 32, 128)
    assert jnp.allclose(out2, ref2, atol=1e-4, rtol=1e-5), "mismatch (row-tiled halo)"

    print("KERNEL_OK")
</pallas_src>

<mosaic_0001>
module attributes {stable_mosaic.version = 11 : i64} {
  func.func @_sobelxy_kernel(%arg0: i32, %arg1: i32, %arg2: memref<1x3x8x16xf32, #tpu.memory_space<vmem>>, %arg3: memref<1x1x2x16xf32, #tpu.memory_space<vmem>>, %arg4: memref<1x1x8x16xf32, #tpu.memory_space<vmem>>) attributes {dimension_semantics = [#tpu.dimension_semantics<parallel>, #tpu.dimension_semantics<parallel>], iteration_bounds = array<i64: 2, 2>, scalar_prefetch = 0 : i64, scratch_operands = 0 : i64, tpu.core_type = #tpu.core_type<tc>, window_params = [{transform_indices = @transform_0, window_bounds = array<i64: 1, 3, 8, 16>}, {transform_indices = @transform_1, window_bounds = array<i64: 1, 1, 2, 16>}, {transform_indices = @transform_2, window_bounds = array<i64: 1, 1, 8, 16>}]} {
    %c0 = arith.constant 0 : index
    %c0_0 = arith.constant 0 : index
    %c0_1 = arith.constant 0 : index
    %c0_2 = arith.constant 0 : index
    %0 = vector.load %arg2[%c0, %c0_0, %c0_1, %c0_2] : memref<1x3x8x16xf32, #tpu.memory_space<vmem>>, vector<1x1x8x16xf32>
    %1 = vector.shape_cast %0 : vector<1x1x8x16xf32> to vector<8x16xf32>
    %c0_3 = arith.constant 0 : index
    %c1 = arith.constant 1 : index
    %c0_4 = arith.constant 0 : index
    %c0_5 = arith.constant 0 : index
    %2 = vector.load %arg2[%c0_3, %c1, %c0_4, %c0_5] : memref<1x3x8x16xf32, #tpu.memory_space<vmem>>, vector<1x1x8x16xf32>
    %3 = vector.shape_cast %2 : vector<1x1x8x16xf32> to vector<8x16xf32>
    %4 = arith.addf %1, %3 : vector<8x16xf32>
    %c0_6 = arith.constant 0 : index
    %c2 = arith.constant 2 : index
    %c0_7 = arith.constant 0 : index
    %c0_8 = arith.constant 0 : index
    %5 = vector.load %arg2[%c0_6, %c2, %c0_7, %c0_8] : memref<1x3x8x16xf32, #tpu.memory_space<vmem>>, vector<1x1x8x16xf32>
    %6 = vector.shape_cast %5 : vector<1x1x8x16xf32> to vector<8x16xf32>
    %7 = arith.addf %4, %6 : vector<8x16xf32>
    %c0_9 = arith.constant 0 : index
    %c0_10 = arith.constant 0 : index
    %c0_11 = arith.constant 0 : index
    %c0_12 = arith.constant 0 : index
    %8 = vector.load %arg3[%c0_9, %c0_10, %c0_11, %c0_12] : memref<1x1x2x16xf32, #tpu.memory_space<vmem>>, vector<1x1x1x16xf32>
    %9 = vector.shape_cast %8 : vector<1x1x1x16xf32> to vector<1x16xf32>
    %c0_13 = arith.constant 0 : index
    %c0_14 = arith.constant 0 : index
    %c1_15 = arith.constant 1 : index
    %c0_16 = arith.constant 0 : index
    %10 = vector.load %arg3[%c0_13, %c0_14, %c1_15, %c0_16] : memref<1x1x2x16xf32, #tpu.memory_space<vmem>>, vector<1x1x1x16xf32>
    %11 = vector.shape_cast %10 : vector<1x1x1x16xf32> to vector<1x16xf32>
    %12 = tpu.concatenate %9, %7, %11 in 0 : vector<1x16xf32>, vector<8x16xf32>, vector<1x16xf32> -> vector<10x16xf32>
    %13 = vector.extract_strided_slice %12 {offsets = [0, 0], sizes = [8, 16], strides = [1, 1]} : vector<10x16xf32> to vector<8x16xf32>
    %14 = vector.extract_strided_slice %12 {offsets = [1, 0], sizes = [8, 16], strides = [1, 1]} : vector<10x16xf32> to vector<8x16xf32>
    %15 = vector.extract_strided_slice %12 {offsets = [2, 0], sizes = [8, 16], strides = [1, 1]} : vector<10x16xf32> to vector<8x16xf32>
    %cst = arith.constant 0.000000e+00 : f32
    %16 = vector.broadcast %cst : f32 to vector<8x1xf32>
    %17 = arith.addf %13, %14 : vector<8x16xf32>
    %18 = vector.extract_strided_slice %17 {offsets = [0, 1], sizes = [8, 15], strides = [1, 1]} : vector<8x16xf32> to vector<8x15xf32>
    %19 = tpu.concatenate %18, %16 in 1 : vector<8x15xf32>, vector<8x1xf32> -> vector<8x16xf32>
    %20 = arith.addf %14, %15 : vector<8x16xf32>
    %21 = vector.extract_strided_slice %20 {offsets = [0, 0], sizes = [8, 15], strides = [1, 1]} : vector<8x16xf32> to vector<8x15xf32>
    %22 = tpu.concatenate %16, %21 in 1 : vector<8x1xf32>, vector<8x15xf32> -> vector<8x16xf32>
    %23 = arith.subf %13, %15 : vector<8x16xf32>
    %24 = arith.addf %23, %19 : vector<8x16xf32>
    %25 = arith.subf %24, %22 : vector<8x16xf32>
    %cst_17 = arith.constant 1.250000e-01 : f32
    %26 = vector.broadcast %cst_17 : f32 to vector<8x16xf32>
    %27 = arith.mulf %25, %26 : vector<8x16xf32>
    %cst_18 = arith.constant 5.000000e-01 : f32
    %28 = vector.broadcast %cst_18 : f32 to vector<8x16xf32>
    %29 = arith.addf %27, %28 : vector<8x16xf32>
    %c0_19 = arith.constant 0 : index
    %c0_20 = arith.constant 0 : index
    %c0_21 = arith.constant 0 : index
    %c0_22 = arith.constant 0 : index
    %30 = vector.load %arg4[%c0_19, %c0_20, %c0_21, %c0_22] : memref<1x1x8x16xf32, #tpu.memory_space<vmem>>, vector<1x1x8x16xf32>
    %31 = vector.shape_cast %30 : vector<1x1x8x16xf32> to vector<8x16xf32>
    %32 = vector.shape_cast %29 : vector<8x16xf32> to vector<1x1x8x16xf32>
    tpu.vector_store %arg4[%c0_19, %c0_20, %c0_21, %c0_22], %32 {strides = array<i32>} : memref<1x1x8x16xf32, #tpu.memory_space<vmem>>, vector<1x1x8x16xf32>,
    return
  }
  func.func @transform_0(%arg0: i32, %arg1: i32) -> (i32, i32, i32, i32) {
    %c0_i32 = arith.constant 0 : i32
    %c0_i32_0 = arith.constant 0 : i32
    %c0_i32_1 = arith.constant 0 : i32
    return %arg0, %c0_i32, %arg1, %c0_i32_0 : i32, i32, i32, i32
  }
  func.func @transform_1(%arg0: i32, %arg1: i32) -> (i32, i32, i32, i32) {
    %c0_i32 = arith.constant 0 : i32
    %c0_i32_0 = arith.constant 0 : i32
    %c0_i32_1 = arith.constant 0 : i32
    return %arg0, %arg1, %c0_i32, %c0_i32_0 : i32, i32, i32, i32
  }
  func.func @transform_2(%arg0: i32, %arg1: i32) -> (i32, i32, i32, i32) {
    %c0_i32 = arith.constant 0 : i32
    %c0_i32_0 = arith.constant 0 : i32
    %c0_i32_1 = arith.constant 0 : i32
    return %arg0, %c0_i32, %arg1, %c0_i32_0 : i32, i32, i32, i32
  }
}

</mosaic_0001>

<llo_original>
// kernel: tpu_custom_call.1
$region0: #{tpu_custom_call.1}
  #allocation0 [shape = 'u32[]', space=smem, size = 0x4, offset = 0x4, fixed_abs, tag = 'smem constant byte address 0x4 - core index']
  #allocation1 [shape = 'u32[144,128]{1,0:T(1,128)}', space=vmem, size = 0x12000, scoped, tag = 'internal scratch']
  %s0 = inlined_call_operand.hbm [shape: f32[2,3,16,16], index: 0, kind: input, shape index: {}]
  %s1 = inlined_call_operand.hbm [shape: f32[2,2,2,16], index: 1, kind: input, shape index: {}]
  %s2 = inlined_call_operand.hbm [shape: f32[2,1,16,16], index: 2, kind: output, shape index: {}]
  %s3 = sld [smem:[#allocation0]]
  $region49: #{tpu_custom_call.1} parent=0
    _
  %s5 = ssub.s32 1, %s3
  %s6 = scalar_select 0, %s5, %s3
  $region1: #{tpu_custom_call.1} parent=0
    #allocation2 [shape = 'u8[24576]{0}', space=vmem, size = 0x6000, scoped, tag = 'input window, operand 0']
    #allocation3 [shape = 's32[2]{0}', space=sflag, size = 0x8, scoped, tag = 'scoped memory for tpu_custom_call.1']
    #allocation4 [shape = 's32[2]{0}', space=sflag, size = 0x8, scoped, tag = 'scoped memory for tpu_custom_call.1']
    #allocation5 [shape = 'u8[2048]{0}', space=vmem, size = 0x800, scoped, tag = 'input window, operand 1']
    #allocation6 [shape = 's32[2]{0}', space=sflag, size = 0x8, scoped, tag = 'scoped memory for tpu_custom_call.1']
    #allocation7 [shape = 'u8[8192]{0}', space=vmem, size = 0x2000, scoped, tag = 'output window, operand 0']
    %7 = vsyncpa [#allocation3], 0
    %s8 = scalar_lea.sflag [#allocation3], 1
    %9 = vsyncpa %s8, 0
    %10 = vsyncpa [#allocation6], 0
    %s11 = scalar_lea.sflag [#allocation6], 1
    %12 = vsyncpa %s11, 0
    %13 = vsyncpa [#allocation4], 0
    %s14 = scalar_lea.sflag [#allocation4], 1
    %15 = vsyncpa %s14, 0
    loop: start=0, step=1, limit=6
    $region2: #{tpu_custom_call.1} parent=1 // loop_pre_header
      _
    $region3: #{tpu_custom_call.1} parent=1 // loop_header
      %s17 = sphi 0, %s21
      %p18 = scmp.ge.s32.totalorder %s17, 6
      %s24 = sphi 0, %s36
      %s25 = sphi 0, %s32
      %s26 = sphi 0, %s24
      %s27 = sphi 0, %s25
      %s28 = sphi 0, %s26
      %s29 = sphi 0, %s27
      %s41 = sphi 0, %s43
      %s44 = sphi 0, %s41
      %s45 = sphi 0, %s44
      %s61 = sphi 0, %s45
      %s69 = sphi 0, %s71
      %s72 = sphi 0, %s69
      %s73 = sphi 0, %s72
      %s89 = sphi 0, %s73
      %s97 = sphi 0, %s99
      %s100 = sphi 0, %s97
      %s101 = sphi 0, %s100
      %s117 = sphi 0, %s101
    $region4: #{tpu_custom_call.1} parent=1 // loop_header_branch
      %20 = sbr.rel (%p18) target = $region8
    $region5: #{tpu_custom_call.1} parent=1 // loop_body
      %s22 = ssub.s32 %s17, 1
      %s23 = ssub.s32 %s17, 2
      %s30 = sadd.s32 1, %s25
      %p31 = scmp.ge.s32.totalorder %s30, 2
      %s32 = scalar_select %p31, 0, %s30
      %s33 = sadd.s32 1, %s24
      %s34 = scalar_select %p31, %s33, %s24
      %p35 = scmp.ge.s32.totalorder %s34, 2
      %s36 = scalar_select %p35, 0, %s34
      %s37 = ssub.s32 %s24, %s36
      %s38 = ssub.s32 %s25, %s32
      %s39 = sor.u32 %s37, %s38
      %p40 = scmp.eq.s32.totalorder %s39, 0
      %s42 = sadd.s32 %s41, 1
      %s43 = scalar_select %p40, %s41, %s42
      %p46 = pneg %p40
      %p47 = scmp.eq.s32.totalorder %s17, 3
      %p48 = por %p46, %p47
      %p49 = scmp.ne.s32.totalorder %s41, %s44
      %p50 = scmp.eq.s32.totalorder %s17, 0
      %p51 = por %p49, %p50
      %p52 = scmp.ne.s32.totalorder %s41, %s44
      %p53 = scmp.eq.s32.totalorder %s22, 3
      %p54 = por %p52, %p53
      %p55 = scmp.ne.s32.totalorder %s44, %s45
      %p56 = scmp.eq.s32.totalorder %s22, 0
      %p57 = por %p55, %p56
      %p58 = scmp.ne.s32.totalorder %s44, %s45
      %p59 = scmp.eq.s32.totalorder %s23, 3
      %p60 = por %p58, %p59
      %p62 = scmp.ne.s32.totalorder %s45, %s61
      %p63 = scmp.eq.s32.totalorder %s23, 0
      %p64 = por %p62, %p63
      %s65 = ssub.s32 %s24, %s36
      %s66 = ssub.s32 %s25, %s32
      %s67 = sor.u32 %s65, %s66
      %p68 = scmp.eq.s32.totalorder %s67, 0
      %s70 = sadd.s32 %s69, 1
      %s71 = scalar_select %p68, %s69, %s70
      %p74 = pneg %p68
      %p75 = scmp.eq.s32.totalorder %s17, 3
      %p76 = por %p74, %p75
      %p77 = scmp.ne.s32.totalorder %s69, %s72
      %p78 = scmp.eq.s32.totalorder %s17, 0
      %p79 = por %p77, %p78
      %p80 = scmp.ne.s32.totalorder %s69, %s72
      %p81 = scmp.eq.s32.totalorder %s22, 3
      %p82 = por %p80, %p81
      %p83 = scmp.ne.s32.totalorder %s72, %s73
      %p84 = scmp.eq.s32.totalorder %s22, 0
      %p85 = por %p83, %p84
      %p86 = scmp.ne.s32.totalorder %s72, %s73
      %p87 = scmp.eq.s32.totalorder %s23, 3
      %p88 = por %p86, %p87
      %p90 = scmp.ne.s32.totalorder %s73, %s89
      %p91 = scmp.eq.s32.totalorder %s23, 0
      %p92 = por %p90, %p91
      %s93 = ssub.s32 %s24, %s36
      %s94 = ssub.s32 %s25, %s32
      %s95 = sor.u32 %s93, %s94
      %p96 = scmp.eq.s32.totalorder %s95, 0
      %s98 = sadd.s32 %s97, 1
      %s99 = scalar_select %p96, %s97, %s98
      %p102 = pneg %p96
      %p103 = scmp.eq.s32.totalorder %s17, 3
      %p104 = por %p102, %p103
      %p105 = scmp.ne.s32.totalorder %s97, %s100
      %p106 = scmp.eq.s32.totalorder %s17, 0
      %p107 = por %p105, %p106
      %p108 = scmp.ne.s32.totalorder %s97, %s100
      %p109 = scmp.eq.s32.totalorder %s22, 3
      %p110 = por %p108, %p109
      %p111 = scmp.ne.s32.totalorder %s100, %s101
      %p112 = scmp.eq.s32.totalorder %s22, 0
      %p113 = por %p111, %p112
      %p114 = scmp.ne.s32.totalorder %s100, %s101
      %p115 = scmp.eq.s32.totalorder %s23, 3
      %p116 = por %p114, %p115
      %p118 = scmp.ne.s32.totalorder %s101, %s117
      %p119 = scmp.eq.s32.totalorder %s23, 0
      %p120 = por %p118, %p119
      %p121 = scmp.le.s32.totalorder 1, %s17
      %p122 = scmp.lt.s32.totalorder %s17, 5
      %p123 = pnand %p121, %p122
      %p124 = pneg %p123
      // Predicated region
      $region9: #{tpu_custom_call.1} parent=5 // pred_check
        _
      $region10: #{tpu_custom_call.1} parent=5 // pred_check_branch
        %126 = sbr.rel (%p123) target = $region12
      $region11: #{tpu_custom_call.1} parent=5 // pred_region
        %s127 = ssub.s32 %s17, 1
      $region12: #{tpu_custom_call.1} parent=5 // pred_fallthru
        _
      %p128 = scmp.lt.s32.totalorder %s17, 4
      // Predicated region
      $region13: #{tpu_custom_call.1} parent=5 // pred_check
        %p129 = pneg %p128
      $region14: #{tpu_custom_call.1} parent=5 // pred_check_branch
        %131 = sbr.rel (%p129) target = $region16
      $region15: #{tpu_custom_call.1} parent=5 // pred_region
        // Predicated region
        $region17: #{tpu_custom_call.1} parent=15 // pred_check
          %p132 = pneg %p51
        $region18: #{tpu_custom_call.1} parent=15 // pred_check_branch
          %134 = sbr.rel (%p132) target = $region20
        $region19: #{tpu_custom_call.1} parent=15 // pred_region
          %s135 = sand.u32 %s41, 1
          %s136 = scalar_lea.sflag [#allocation3], %s135
          %s137 = sand.u32 %s41, 1
          %s138 = smul.addr %s137, 24
          %s139 = scalar_lea.vmem [#allocation2], %s138
          %s141 = ssub.s32 384, 384
          %142 = vsyncadd %s136, %s141
          %s143 = smul.addr %s24, 6
          %s144 = sadd.s32 %s25, %s143
          %s145 = smul.addr %s144, 128
          %s146 = scalar_lea.hbm %s0, %s145
          %s147 = sshll.u32 %s139, 4
          %s148 = int_to_ptr.vmem [resolvable:$true] %s147
          %153 = dma.hbm_to_vmem [thread:$0]  %s146, 384, %s148, %s136, 256, 128, 8
        $region20: #{tpu_custom_call.1} parent=15 // pred_fallthru
          _
        // Predicated region
        $region21: #{tpu_custom_call.1} parent=15 // pred_check
          %p154 = pneg %p79
        $region22: #{tpu_custom_call.1} parent=15 // pred_check_branch
          %156 = sbr.rel (%p154) target = $region24
        $region23: #{tpu_custom_call.1} parent=15 // pred_region
          %s157 = sand.u32 %s69, 1
          %s158 = scalar_lea.sflag [#allocation6], %s157
          %s159 = sand.u32 %s69, 1
          %s160 = smul.addr %s159, 2
          %s161 = scalar_lea.vmem [#allocation5], %s160
          %s163 = ssub.s32 32, 32
          %164 = vsyncadd %s158, %s163
          %s165 = smul.addr %s24, 2
          %s166 = sadd.s32 %s25, %s165
          %s167 = smul.addr %s166, 32
          %s168 = scalar_lea.hbm %s1, %s167
          %s170 = sshll.u32 %s161, 4
          %s171 = int_to_ptr.vmem [resolvable:$true] %s170
          %173 = dma.hbm_to_vmem [thread:$0]  %s168, 32, %s171, %s158
        $region24: #{tpu_custom_call.1} parent=15 // pred_fallthru
          _
      $region16: #{tpu_custom_call.1} parent=5 // pred_fallthru
        _
      %p174 = scmp.le.s32.totalorder 1, %s17
      %p175 = scmp.lt.s32.totalorder %s17, 5
      %p176 = pnand %p174, %p175
      %p177 = pneg %p176
      // Predicated region
      $region25: #{tpu_custom_call.1} parent=5 // pred_check
        _
      $region26: #{tpu_custom_call.1} parent=5 // pred_check_branch
        %179 = sbr.rel (%p176) target = $region28
      $region27: #{tpu_custom_call.1} parent=5 // pred_region
        %s180 = ssub.s32 %s17, 1
        %s181 = sand.u32 %s44, 1
        %s182 = scalar_lea.sflag [#allocation3], %s181
        %s183 = sand.u32 %s44, 1
        %s184 = smul.addr %s183, 24
        %s185 = scalar_lea.vmem [#allocation2], %s184
        // Predicated region
        $region29: #{tpu_custom_call.1} parent=27 // pred_check
          %p186 = pneg %p57
        $region30: #{tpu_custom_call.1} parent=27 // pred_check_branch
          %188 = sbr.rel (%p186) target = $region32
        $region31: #{tpu_custom_call.1} parent=27 // pred_region
          %189 = dma.done %s182, 384
        $region32: #{tpu_custom_call.1} parent=27 // pred_fallthru
          _
        %s190 = sand.u32 %s72, 1
        %s191 = scalar_lea.sflag [#allocation6], %s190
        %s192 = sand.u32 %s72, 1
        %s193 = smul.addr %s192, 2
        %s194 = scalar_lea.vmem [#allocation5], %s193
        // Predicated region
        $region33: #{tpu_custom_call.1} parent=27 // pred_check
          %p195 = pneg %p85
        $region34: #{tpu_custom_call.1} parent=27 // pred_check_branch
          %197 = sbr.rel (%p195) target = $region36
        $region35: #{tpu_custom_call.1} parent=27 // pred_region
          %198 = dma.done %s191, 32
        $region36: #{tpu_custom_call.1} parent=27 // pred_fallthru
          _
        %s199 = sand.u32 %s44, 1
        %s200 = scalar_lea.sflag [#allocation3], %s199
        %s201 = sand.u32 %s44, 1
        %s202 = smul.addr %s201, 24
        %s203 = scalar_lea.vmem [#allocation2], %s202
        %p204 = pneg %p57
        %p205 = pneg %p54
        %s206 = sand.u32 %s72, 1
        %s207 = scalar_lea.sflag [#allocation6], %s206
        %s208 = sand.u32 %s72, 1
        %s209 = smul.addr %s208, 2
        %s210 = scalar_lea.vmem [#allocation5], %s209
        %p211 = pneg %p85
        %p212 = pneg %p82
        %p213 = pneg %p113
        %p214 = pneg %p110
        %s215 = sand.u32 %s100, 1
        %s216 = scalar_lea.sflag [#allocation4], %s215
        %s217 = sand.u32 %s100, 1
        %s218 = smul.addr %s217, 8
        %s219 = scalar_lea.vmem [#allocation7], %s218
        %v220 = vld [vmem:[%s185] sm:$0xff]
        %s221 = scalar_lea.vmem %s185, 8 [#allocation2]
        %v222 = vld [vmem:[%s221] sm:$0xff]
        %v223 = vadd.f32 %v220, %v222
        %s224 = scalar_lea.vmem %s185, 16 [#allocation2]
        %v225 = vld [vmem:[%s224] sm:$0xff]
        %v226 = vadd.f32 %v223, %v225
        %v227 = vld [vmem:[%s194] sm:$0x1]
        %v228 = vld [vmem:[%s194 + $0x1] sm:$0x1]
        %v230 = vrot.slane %v226, 7
        %v233 = vrot.slane %v228, 7
        %vm235 = vcmask 1040384
        %v236 = vsel %vm235, %v227, %v230
        %v237 = vsel %vm235, %v230, %v233
        %vm240 = vcmask 1046528
        %v241 = vrot.slane %v236, 1
        %v242 = vrot.slane %v237, 1
        %v243 = vsel %vm240, %v241, %v242
        %v245 = vadd.f32 %v236, %v243
        %247 = vrot.lane.b32.xlu0 %v245, 127
        %v248 = vpop.permute.xlu0 %247
        %vm250 = vcmask 121856
        %v251 = vsel %vm250, %v248, 0.0
        %v253 = vadd.f32 %v237, %v242
        %v255 = vrot.slane %v245, 1
        %v256 = vrot.slane %v253, 1
        %v257 = vsel %vm240, %v255, %v256
        %258 = vrot.lane.b32.xlu0 %v257, 1
        %v259 = vpop.permute.xlu0 %258
        %vm261 = vcmask 7168
        %v262 = vsel %vm261, 0.0, %v259
        %vm263 = vcmask 1045504
        %v264 = vrot.slane %v236, 2
        %v265 = vrot.slane %v237, 2
        %v266 = vsel %vm263, %v264, %v265
        %v268 = vsub.f32 %v236, %v266
        %v269 = vadd.f32 %v268, %v251
        %v270 = vsub.f32 %v269, %v262
        %v271 = vmul.f32 %v270, 0.125
        %v272 = vadd.f32 %v271, 0.5
        %vm273 = vcmask 130048
        %274 = vst.msk [vmem:[%s219] sm:$0xff] %vm273, %v272
        %s275 = sand.u32 %s100, 1
        %s276 = scalar_lea.sflag [#allocation4], %s275
        %s277 = sand.u32 %s100, 1
        %s278 = smul.addr %s277, 8
        %s279 = scalar_lea.vmem [#allocation7], %s278
        // Predicated region
        $region37: #{tpu_custom_call.1} parent=27 // pred_check
          %p280 = pneg %p110
        $region38: #{tpu_custom_call.1} parent=27 // pred_check_branch
          %282 = sbr.rel (%p280) target = $region40
        $region39: #{tpu_custom_call.1} parent=27 // pred_region
          %s284 = ssub.s32 128, 128
          %285 = vsyncadd %s276, %s284
          %s286 = smul.addr %s26, 2
          %s287 = sadd.s32 %s27, %s286
          %s288 = smul.addr %s287, 128
          %s289 = scalar_lea.hbm %s2, %s288
          %s291 = sshll.u32 %s279, 4
          %s292 = int_to_ptr.vmem [resolvable:$true] %s291
          %294 = dma.vmem_to_hbm [thread:$0]  %s292, 128, %s289, %s276
        $region40: #{tpu_custom_call.1} parent=27 // pred_fallthru
          _
      $region28: #{tpu_custom_call.1} parent=5 // pred_fallthru
        _
      %p295 = scmp.le.s32.totalorder 2, %s17
      // Predicated region
      $region41: #{tpu_custom_call.1} parent=5 // pred_check
        %p296 = pneg %p295
      $region42: #{tpu_custom_call.1} parent=5 // pred_check_branch
        %298 = sbr.rel (%p296) target = $region44
      $region43: #{tpu_custom_call.1} parent=5 // pred_region
        %s299 = ssub.s32 %s17, 2
        // Predicated region
        $region45: #{tpu_custom_call.1} parent=43 // pred_check
          %p300 = pneg %p116
        $region46: #{tpu_custom_call.1} parent=43 // pred_check_branch
          %302 = sbr.rel (%p300) target = $region48
        $region47: #{tpu_custom_call.1} parent=43 // pred_region
          %s303 = sand.u32 %s101, 1
          %s304 = scalar_lea.sflag [#allocation4], %s303
          %s305 = sand.u32 %s101, 1
          %s306 = smul.addr %s305, 8
          %s307 = scalar_lea.vmem [#allocation7], %s306
          %308 = dma.done %s304, 128
        $region48: #{tpu_custom_call.1} parent=43 // pred_fallthru
          _
      $region44: #{tpu_custom_call.1} parent=5 // pred_fallthru
        _
    $region6: #{tpu_custom_call.1} parent=1 // loop_footer
      %s21 = sadd.s32 1, %s17
    $region7: #{tpu_custom_call.1} parent=1 // loop_footer_branch
      %16 = sbr.rel target = $region3
    $region8: #{tpu_custom_call.1} parent=1 // loop_exit
      _
    %309 = vsyncpa [#allocation3], 1
    %s310 = scalar_lea.sflag [#allocation3], 1
    %311 = vsyncpa %s310, 1
    %312 = vsyncpa [#allocation6], 1
    %s313 = scalar_lea.sflag [#allocation6], 1
    %314 = vsyncpa %s313, 1
    %315 = vsyncpa [#allocation4], 1
    %s316 = scalar_lea.sflag [#allocation4], 1
    %317 = vsyncpa %s316, 1

</llo_original>
